<compile_context>
chip_gen: v6e
topology: v6e:2x2x1
jax: 0.10.0
libtpu: 0.0.40
codegen_flags: <defaults>
</compile_context>

<pallas_src>
import functools

import jax
import jax.numpy as jnp
from jax.experimental import pallas as pl
from jax.experimental.pallas import tpu as pltpu

F_IN, H, F_OUT = 11, 25, 1        # EvaluatorModel dims
F_PAD, H_PAD = 16, 32             # sublane-friendly padded dims
LANE_CHUNK = 8192                 # in-kernel strip width: (32, 8192) f32 temp ~ 1 MiB
TB_CAP = 65536                    # max batch-tile (lanes) per grid step
SMALL_B_THRESHOLD = 2048          # below this, pure-XLA path beats layout plumbing + launch


def _round_up(n, m):
    return (n + m - 1) // m * m


def _pick_tile(B):
    """Pick a 128-aligned batch tile: as large as possible (DMA amortization), but
    split into >=2 grid steps when there's enough work so the 'parallel' axis can
    shard across v7x's two TensorCores."""
    b128 = _round_up(max(B, 1), 128)
    n_tiles = -(-b128 // TB_CAP)
    if n_tiles == 1 and b128 >= 2 * SMALL_B_THRESHOLD:
        n_tiles = 2
    tb = _round_up(-(-b128 // n_tiles), 128)
    return tb, tb * n_tiles


def mlp_kernel(x_ref, w1_ref, b1_ref, w2_ref, b2_ref, o_ref):
    # x:  (F_PAD, TB) bf16    w1: (H_PAD, F_PAD) bf16
    # b1: (H_PAD, 1) f32      w2: (H_PAD, 1) f32    b2: (1, 1) f32
    # o:  (1, TB) f32  (lane-dense)
    tb = x_ref.shape[1]
    n_full, rem = divmod(tb, LANE_CHUNK)

    # Load tiny residents once (outside the strip loop).
    w1 = w1_ref[...]
    b1 = b1_ref[...]
    w2 = w2_ref[...]
    b2 = b2_ref[...]

    def do_chunk(start, width):
        xc = x_ref[:, start:start + width]                               # static slice: view
        h = jnp.dot(w1, xc, preferred_element_type=jnp.float32)          # MXU, f32 accum
        h = jnp.maximum(h + b1, 0.0)                                     # VPU bias + ReLU
        # layer-2 has output width 1: VPU multiply + sublane (XLU) reduce beats an
        # N=1 MXU pass.
        y = jnp.sum(h * w2, axis=0, keepdims=True) + b2
        o_ref[:, start:start + width] = y.astype(o_ref.dtype)

    for c in range(n_full):                                              # static, <= 8 iters
        do_chunk(c * LANE_CHUNK, LANE_CHUNK)
    if rem:
        do_chunk(n_full * LANE_CHUNK, rem)


@functools.partial(jax.jit, static_argnames=("force_pallas", "tb"))
def evaluator_forward(x, w1, b1, w2, b2, *, force_pallas=False, tb=None):
    """x: (B, 11) f32.  w1: (25, 11), b1: (25,), w2: (1, 25), b2: (1,) (torch layout).

    Returns (B, 1) f32, matching EvaluatorModel.forward.
    """
    B = x.shape[0]

    # Small-batch fast path: the padded transpose + kernel launch exceed the work.
    if not force_pallas and B < SMALL_B_THRESHOLD:
        return (jnp.maximum(x @ w1.T + b1, 0.0) @ w2.T + b2).astype(jnp.float32)

    if tb is None:
        tb, bp = _pick_tile(B)
    else:
        tb = _round_up(tb, 128)
        bp = _round_up(B, tb)
    n_tiles = bp // tb

    # ---- layout plumbing (XLA side): batch -> lanes, zero-pad, bf16 storage ----
    # TODO(synk): if the producer can emit x feature-major (11, B) (or allow_input_fusion
    # is verified to fuse this transpose/pad), feed it directly and skip this materialized
    # HBM copy — the kernel is purely bandwidth-bound.
    x_t = jnp.zeros((F_PAD, bp), jnp.bfloat16).at[:F_IN, :B].set(x.T.astype(jnp.bfloat16))
    w1_p = jnp.zeros((H_PAD, F_PAD), jnp.bfloat16).at[:H, :F_IN].set(w1.astype(jnp.bfloat16))
    b1_p = jnp.zeros((H_PAD, 1), jnp.float32).at[:H, 0].set(b1.astype(jnp.float32))
    w2_p = jnp.zeros((H_PAD, 1), jnp.float32).at[:H, 0].set(w2[0].astype(jnp.float32))
    b2_p = b2.reshape(1, 1).astype(jnp.float32)

    flops = 2 * H_PAD * F_PAD * bp + 4 * H_PAD * bp
    bytes_accessed = (F_PAD * bp * 2                       # x_t read (bf16)
                      + bp * 4                             # output write (f32)
                      + H_PAD * (F_PAD * 2 + 8) + 4)       # resident weights/biases

    out_t = pl.pallas_call(
        mlp_kernel,
        out_shape=jax.ShapeDtypeStruct((1, bp), jnp.float32),
        grid=(n_tiles,),
        in_specs=[
            pl.BlockSpec((F_PAD, tb), lambda i: (0, i)),       # x tile, batch on lanes
            pl.BlockSpec((H_PAD, F_PAD), lambda i: (0, 0)),    # W1  (resident)
            pl.BlockSpec((H_PAD, 1), lambda i: (0, 0)),        # b1  (resident)
            pl.BlockSpec((H_PAD, 1), lambda i: (0, 0)),        # w2  (resident)
            pl.BlockSpec((1, 1), lambda i: (0, 0)),            # b2  (resident)
        ],
        out_specs=pl.BlockSpec((1, tb), lambda i: (0, i)),     # lane-dense output
        compiler_params=pltpu.CompilerParams(
            dimension_semantics=("parallel",),                 # megacore shard on v7x
            vmem_limit_bytes=32 << 20,                         # > v5e's 16 MiB scoped default
        ),
        cost_estimate=pl.CostEstimate(
            flops=flops, transcendentals=0, bytes_accessed=bytes_accessed),
    )(x_t, w1_p, b1_p, w2_p, b2_p)

    # Drop batch padding, return torch-shaped (B, 1).
    return out_t[0, :B].reshape(B, 1)


def init_params(key):
    """Mirrors EvaluatorModel._initialize_with_random_weights:
    kaiming_uniform_ (a=0 -> bound = sqrt(6 / fan_in)), zero biases, torch layout."""
    k1, k2 = jax.random.split(key)

    def kaiming_uniform(k, fan_out, fan_in):
        bound = (6.0 / fan_in) ** 0.5
        return jax.random.uniform(k, (fan_out, fan_in), jnp.float32, -bound, bound)

    w1 = kaiming_uniform(k1, H, F_IN)        # (25, 11)
    b1 = jnp.zeros((H,), jnp.float32)
    w2 = kaiming_uniform(k2, F_OUT, H)       # (1, 25)
    b2 = jnp.zeros((F_OUT,), jnp.float32)
    return w1, b1, w2, b2


if __name__ == "__main__":
    key = jax.random.PRNGKey(0)
    kx1, kx2, kp = jax.random.split(key, 3)
    w1, b1, w2, b2 = init_params(kp)

    def ref_f32(x):
        return jnp.maximum(x @ w1.T + b1, 0.0) @ w2.T + b2

    def ref_bf16_inputs(x):
        # Reference with the same bf16 input/weight quantization (f32 accumulation).
        xq = x.astype(jnp.bfloat16).astype(jnp.float32)
        w1q = w1.astype(jnp.bfloat16).astype(jnp.float32)
        return jnp.maximum(xq @ w1q.T + b1, 0.0) @ w2.T + b2

    # 1) small batch forced through the Pallas kernel (single 128-lane tile).
    B1 = 8
    x1 = jax.random.normal(kx1, (B1, F_IN), jnp.float32)
    out1 = jax.block_until_ready(evaluator_forward(x1, w1, b1, w2, b2, force_pallas=True))
    assert out1.shape == (B1, 1)
    assert jnp.allclose(out1, ref_bf16_inputs(x1), atol=1e-3, rtol=1e-3)
    assert jnp.allclose(out1, ref_f32(x1), atol=1e-1, rtol=1e-1)   # bf16-input tolerance

    # 2) ragged multi-tile batch through the Pallas kernel (padding + grid > 1).
    B2 = 2500
    x2 = jax.random.normal(kx2, (B2, F_IN), jnp.float32)
    out2 = jax.block_until_ready(
        evaluator_forward(x2, w1, b1, w2, b2, force_pallas=True, tb=512))
    assert out2.shape == (B2, 1)
    assert jnp.allclose(out2, ref_bf16_inputs(x2), atol=1e-3, rtol=1e-3)

    # 3) small-batch auto path (pure-XLA fast path, f32 exact).
    out3 = jax.block_until_ready(evaluator_forward(x1, w1, b1, w2, b2))
    assert out3.shape == (B1, 1)
    assert jnp.allclose(out3, ref_f32(x1), atol=1e-5, rtol=1e-5)

    print("KERNEL_OK")
</pallas_src>

<mosaic_0001>
module attributes {stable_mosaic.version = 11 : i64} {
  func.func @mlp_kernel(%arg0: i32, %arg1: memref<16x128xbf16, #tpu.memory_space<vmem>>, %arg2: memref<32x16xbf16, #tpu.memory_space<vmem>>, %arg3: memref<32x1xf32, #tpu.memory_space<vmem>>, %arg4: memref<32x1xf32, #tpu.memory_space<vmem>>, %arg5: memref<1x1xf32, #tpu.memory_space<vmem>>, %arg6: memref<1x128xf32, #tpu.memory_space<vmem>>) attributes {dimension_semantics = [#tpu.dimension_semantics<parallel>], iteration_bounds = array<i64: 1>, scalar_prefetch = 0 : i64, scratch_operands = 0 : i64, tpu.core_type = #tpu.core_type<tc>, window_params = [{transform_indices = @transform_0, window_bounds = array<i64: 16, 128>}, {pipeline_mode = #tpu.pipeline_mode<synchronous>, transform_indices = @transform_1, window_bounds = array<i64: 32, 16>}, {pipeline_mode = #tpu.pipeline_mode<synchronous>, transform_indices = @transform_2, window_bounds = array<i64: 32, 1>}, {pipeline_mode = #tpu.pipeline_mode<synchronous>, transform_indices = @transform_3, window_bounds = array<i64: 32, 1>}, {pipeline_mode = #tpu.pipeline_mode<synchronous>, transform_indices = @transform_4, window_bounds = array<i64: 1, 1>}, {transform_indices = @transform_5, window_bounds = array<i64: 1, 128>}]} {
    %c0 = arith.constant 0 : index
    %c0_0 = arith.constant 0 : index
    %0 = vector.load %arg2[%c0, %c0_0] : memref<32x16xbf16, #tpu.memory_space<vmem>>, vector<32x16xbf16>
    %c0_1 = arith.constant 0 : index
    %c0_2 = arith.constant 0 : index
    %1 = vector.load %arg3[%c0_1, %c0_2] : memref<32x1xf32, #tpu.memory_space<vmem>>, vector<32x1xf32>
    %c0_3 = arith.constant 0 : index
    %c0_4 = arith.constant 0 : index
    %2 = vector.load %arg4[%c0_3, %c0_4] : memref<32x1xf32, #tpu.memory_space<vmem>>, vector<32x1xf32>
    %c0_5 = arith.constant 0 : index
    %c0_6 = arith.constant 0 : index
    %3 = vector.load %arg5[%c0_5, %c0_6] : memref<1x1xf32, #tpu.memory_space<vmem>>, vector<1x1xf32>
    %c0_7 = arith.constant 0 : index
    %c0_8 = arith.constant 0 : index
    %4 = vector.load %arg1[%c0_7, %c0_8] : memref<16x128xbf16, #tpu.memory_space<vmem>>, vector<16x128xbf16>
    %cst = arith.constant dense<0.000000e+00> : vector<32x128xf32>
    %5 = tpu.matmul %0, %4, %cst {dimension_numbers = #tpu.dot_dimension_numbers<[1], [0], [0], [1], [0, 0, 1, 1], [], []>} : vector<32x16xbf16>, vector<16x128xbf16>, vector<32x128xf32> -> vector<32x128xf32>
    %6 = vector.broadcast %1 : vector<32x1xf32> to vector<32x128xf32>
    %7 = arith.addf %5, %6 : vector<32x128xf32>
    %cst_9 = arith.constant 0.000000e+00 : f32
    %8 = vector.broadcast %cst_9 : f32 to vector<32x128xf32>
    %9 = arith.maximumf %7, %8 : vector<32x128xf32>
    %10 = vector.broadcast %2 : vector<32x1xf32> to vector<32x128xf32>
    %11 = arith.mulf %9, %10 : vector<32x128xf32>
    %cst_10 = arith.constant dense<0.000000e+00> : vector<128xf32>
    %12 = vector.multi_reduction <add>, %11, %cst_10 [0] : vector<32x128xf32> to vector<128xf32>
    %13 = vector.shape_cast %12 : vector<128xf32> to vector<1x128xf32>
    %14 = vector.broadcast %3 : vector<1x1xf32> to vector<1x128xf32>
    %15 = arith.addf %13, %14 : vector<1x128xf32>
    %c0_11 = arith.constant 0 : index
    %c0_12 = arith.constant 0 : index
    %16 = vector.load %arg6[%c0_11, %c0_12] : memref<1x128xf32, #tpu.memory_space<vmem>>, vector<1x128xf32>
    tpu.vector_store %arg6[%c0_11, %c0_12], %15 {strides = array<i32>} : memref<1x128xf32, #tpu.memory_space<vmem>>, vector<1x128xf32>,
    return
  }
  func.func @transform_0(%arg0: i32) -> (i32, i32) {
    %c0_i32 = arith.constant 0 : i32
    %c0_i32_0 = arith.constant 0 : i32
    return %c0_i32, %arg0 : i32, i32
  }
  func.func @transform_1(%arg0: i32) -> (i32, i32) {
    %c0_i32 = arith.constant 0 : i32
    %c0_i32_0 = arith.constant 0 : i32
    %c0_i32_1 = arith.constant 0 : i32
    return %c0_i32, %c0_i32_0 : i32, i32
  }
  func.func @transform_2(%arg0: i32) -> (i32, i32) {
    %c0_i32 = arith.constant 0 : i32
    %c0_i32_0 = arith.constant 0 : i32
    %c0_i32_1 = arith.constant 0 : i32
    return %c0_i32, %c0_i32_0 : i32, i32
  }
  func.func @transform_3(%arg0: i32) -> (i32, i32) {
    %c0_i32 = arith.constant 0 : i32
    %c0_i32_0 = arith.constant 0 : i32
    %c0_i32_1 = arith.constant 0 : i32
    return %c0_i32, %c0_i32_0 : i32, i32
  }
  func.func @transform_4(%arg0: i32) -> (i32, i32) {
    %c0_i32 = arith.constant 0 : i32
    %c0_i32_0 = arith.constant 0 : i32
    %c0_i32_1 = arith.constant 0 : i32
    return %c0_i32, %c0_i32_0 : i32, i32
  }
  func.func @transform_5(%arg0: i32) -> (i32, i32) {
    %c0_i32 = arith.constant 0 : i32
    %c0_i32_0 = arith.constant 0 : i32
    return %c0_i32, %arg0 : i32, i32
  }
}

</mosaic_0001>

<llo_original>
// kernel: evaluator_forward.1
$region0: #{evaluator_forward.1}
  #allocation0 [shape = 'u32[]', space=smem, size = 0x4, offset = 0x4, fixed_abs, tag = 'smem constant byte address 0x4 - core index']
  #allocation1 [shape = 'u32[144,128]{1,0:T(1,128)}', space=vmem, size = 0x12000, scoped, tag = 'internal scratch']
  #allocation2 [shape = 'f32[1,1]{1,0:T(1,128)S(1)}', space=vmem, size = 0x200, scoped, tag = 'scoped memory for evaluator_forward.1']
  %s0 = inlined_call_operand.vmem [shape: bf16[16,128], index: 0, kind: input, shape index: {}]
  %s1 = inlined_call_operand.vmem [shape: bf16[32,16], index: 1, kind: input, shape index: {}]
  %s2 = inlined_call_operand.vmem [shape: f32[32,1], index: 2, kind: input, shape index: {}]
  %s3 = inlined_call_operand.vmem [shape: f32[32,1], index: 3, kind: input, shape index: {}]
  %s4 = inlined_call_operand.<no memory space> [shape: f32[1,1], index: 4, kind: input, shape index: {}]
  %s5 = inlined_call_operand.vmem [shape: f32[1,128], index: 5, kind: output, shape index: {}]
  %s6 = sld [smem:[#allocation0]]
  $region30: #{evaluator_forward.1} parent=0
    _
  %s8 = ssub.s32 1, %s6
  %s9 = scalar_select 0, %s8, %s6
  %v10 = vstv %s4
  %11 = vst [vmem:[#allocation2] sm:$0x1] %v10
  // Predicated region
  $region2: #{evaluator_forward.1} parent=0 // pred_check
    _
  $region3: #{evaluator_forward.1} parent=0 // pred_check_branch
    %13 = sbr.rel (0) target = $region5
  $region4: #{evaluator_forward.1} parent=0 // pred_region
    _
  $region5: #{evaluator_forward.1} parent=0 // pred_fallthru
    _
  // Predicated region
  $region6: #{evaluator_forward.1} parent=0 // pred_check
    _
  $region7: #{evaluator_forward.1} parent=0 // pred_check_branch
    %15 = sbr.rel (0) target = $region9
  $region8: #{evaluator_forward.1} parent=0 // pred_region
    _
  $region9: #{evaluator_forward.1} parent=0 // pred_fallthru
    _
  // Predicated region
  $region10: #{evaluator_forward.1} parent=0 // pred_check
    _
  $region11: #{evaluator_forward.1} parent=0 // pred_check_branch
    %17 = sbr.rel (0) target = $region13
  $region12: #{evaluator_forward.1} parent=0 // pred_region
    _
  $region13: #{evaluator_forward.1} parent=0 // pred_fallthru
    _
  // Predicated region
  $region14: #{evaluator_forward.1} parent=0 // pred_check
    _
  $region15: #{evaluator_forward.1} parent=0 // pred_check_branch
    %19 = sbr.rel (0) target = $region17
  $region16: #{evaluator_forward.1} parent=0 // pred_region
    _
  $region17: #{evaluator_forward.1} parent=0 // pred_fallthru
    _
  // Predicated region
  $region18: #{evaluator_forward.1} parent=0 // pred_check
    _
  $region19: #{evaluator_forward.1} parent=0 // pred_check_branch
    %21 = sbr.rel (0) target = $region21
  $region20: #{evaluator_forward.1} parent=0 // pred_region
    _
  $region21: #{evaluator_forward.1} parent=0 // pred_fallthru
    _
  %v23 = vld [vmem:[%s1] sm:$0xf]
  %v24 = vld [vmem:[%s1 + $0x4] sm:$0xf]
  %v25 = vld [vmem:[%s1 + $0x8] sm:$0xf]
  %v26 = vld [vmem:[%s1 + $0xc] sm:$0xf]
  %v27 = vld [vmem:[%s2] sm:$0xff]
  %v28 = vld [vmem:[%s2 + $0x8] sm:$0xff]
  %v29 = vld [vmem:[%s2 + $0x10] sm:$0xff]
  %v30 = vld [vmem:[%s2 + $0x18] sm:$0xff]
  %v31 = vld [vmem:[%s3] sm:$0xff]
  %v32 = vld [vmem:[%s3 + $0x8] sm:$0xff]
  %v33 = vld [vmem:[%s3 + $0x10] sm:$0xff]
  %v34 = vld [vmem:[%s3 + $0x18] sm:$0xff]
  %v35 = vld [vmem:[#allocation2] sm:$0x1]
  %v36 = vld [vmem:[%s0] sm:$0xf]
  %v37 = vld [vmem:[%s0 + $0x4] sm:$0xf]
  %39 = vset.pattern.permute.xlu0 0
  %40 = vperm.xlu0 %39, %v27
  %v41 = vpop.permute.xlu0 %40
  %44 = vset.pattern.permute.xlu0 0
  %45 = vperm.xlu0 %44, %v28
  %v46 = vpop.permute.xlu0 %45
  %49 = vset.pattern.permute.xlu0 0
  %50 = vperm.xlu0 %49, %v29
  %v51 = vpop.permute.xlu0 %50
  %54 = vset.pattern.permute.xlu0 0
  %55 = vperm.xlu0 %54, %v30
  %v56 = vpop.permute.xlu0 %55
  %v62 = vunpack.c.l.b16 %v23
  %v63 = vunpack.c.l.b16 %v24
  %v64 = vunpack.c.l.b16 %v25
  %v65 = vunpack.c.l.b16 %v26
  %v66 = vpack.c.b16 %v63, %v62
  %v67 = vpack.c.b16 %v65, %v64
  %v70 = vunpack.c.l.b16 %v36
  %v71 = vunpack.c.l.b16 %v37
  %v72 = vpack.c.b16 %v71, %v70
  %vm74 = vcmask 130048
  %v76 = vsel %vm74, %v66, 0
  %v79 = vsel %vm74, %v67, 0
  %81 = vmatprep.subr.bf16.mxu0 0
  %82 = vmatpush1.bf16.msra.mxu0 0
  %83 = vmatprep.subr.bf16.mxu0 0
  %84 = vmatpush1.bf16.msra.mxu0 0
  %85 = vmatprep.subr.bf16.mxu0 0
  %86 = vmatpush1.bf16.msra.mxu0 0
  %87 = vmatprep.subr.bf16.mxu0 0
  %88 = vmatpush1.bf16.msra.mxu0 0
  %89 = vmatprep.subr.bf16.mxu0 0
  %90 = vmatpush1.bf16.msra.mxu0 0
  %91 = vmatprep.subr.bf16.mxu0 0
  %92 = vmatpush1.bf16.msra.mxu0 0
  %93 = vmatprep.subr.bf16.mxu0 0
  %94 = vmatpush1.bf16.msra.mxu0 0
  %95 = vmatprep.subr.bf16.mxu0 0
  %96 = vmatpush1.bf16.msra.mxu0 %v72
  %97 = vmatprep.subr.bf16.mxu0 0
  %98 = vmatpush2.bf16.msra.mxu0 0
  %99 = vmatprep.subr.bf16.mxu0 0
  %100 = vmatpush2.bf16.msra.mxu0 0
  %101 = vmatprep.subr.bf16.mxu0 0
  %102 = vmatpush2.bf16.msra.mxu0 0
  %103 = vmatprep.subr.bf16.mxu0 0
  %104 = vmatpush2.bf16.msra.mxu0 0
  %105 = vmatprep.subr.bf16.mxu0 0
  %106 = vmatpush2.bf16.msra.mxu0 0
  %107 = vmatprep.subr.bf16.mxu0 0
  %108 = vmatpush2.bf16.msra.mxu0 0
  %109 = vmatprep.subr.bf16.mxu0 0
  %110 = vmatpush2.bf16.msra.mxu0 0
  %111 = vmatprep.subr.bf16.mxu0 0
  %112 = vmatpush2.bf16.msra.mxu0 0
  %113 = vmatprep.mubr.bf16.mxu0 0
  %114 = vmatmul.mubr.bf16.gmra.mxu0 %v76
  %v115 = vpop.f32.mrf.mxu0
  %v116 = vadd.f32 %v41, %v115
  %v117 = vpop.f32.mrf.mxu0
  %v118 = vpop.f32.mrf.mxu0
  %v119 = vadd.f32 %v46, %v118
  %v120 = vpop.f32.mrf.mxu0
  %121 = vmatprep.mubr.bf16.mxu0 0
  %122 = vmatmul.mubr.bf16.gmra.mxu0 %v79
  %v123 = vpop.f32.mrf.mxu0
  %v124 = vadd.f32 %v51, %v123
  %v125 = vpop.f32.mrf.mxu0
  %v126 = vpop.f32.mrf.mxu0
  %v127 = vadd.f32 %v56, %v126
  %v128 = vpop.f32.mrf.mxu0
  %129 = vdwg.mxu0
  %v130 = vmax.f32 %v116, 0.0
  %v131 = vmax.f32 %v119, 0.0
  %v132 = vmax.f32 %v124, 0.0
  %v133 = vmax.f32 %v127, 0.0
  %135 = vset.pattern.permute.xlu0 0
  %136 = vperm.xlu0 %135, %v31
  %v137 = vpop.permute.xlu0 %136
  %140 = vset.pattern.permute.xlu0 0
  %141 = vperm.xlu0 %140, %v32
  %v142 = vpop.permute.xlu0 %141
  %145 = vset.pattern.permute.xlu0 0
  %146 = vperm.xlu0 %145, %v33
  %v147 = vpop.permute.xlu0 %146
  %150 = vset.pattern.permute.xlu0 0
  %151 = vperm.xlu0 %150, %v34
  %v152 = vpop.permute.xlu0 %151
  %v154 = vmul.f32 %v130, %v137
  %v155 = vmul.f32 %v131, %v142
  %v156 = vmul.f32 %v132, %v147
  %v157 = vmul.f32 %v133, %v152
  %v158 = vadd.f32 %v154, %v155
  %v159 = vadd.f32 %v158, %v156
  %v160 = vadd.f32 %v159, %v157
  %v161 = vrot.slane %v160, 4
  %v162 = vadd.f32 %v160, %v161
  %v163 = vrot.slane %v162, 2
  %v164 = vadd.f32 %v162, %v163
  %v165 = vrot.slane %v164, 1
  %v166 = vadd.f32 %v164, %v165
  %168 = vset.pattern.permute.xlu0 0
  %169 = vperm.xlu0 %168, %v35
  %v170 = vpop.permute.xlu0 %169
  %v172 = vlaneseq
  %v173 = vshrl.u32 %v172, 7
  %v174 = vsub.s32 0, %v173
  %v175 = vrot.slane %v170, %v174
  %v176 = vadd.f32 %v166, %v175
  %177 = vst [vmem:[%s5] sm:$0x1] %v176
  // Predicated region
  $region22: #{evaluator_forward.1} parent=0 // pred_check
    _
  $region23: #{evaluator_forward.1} parent=0 // pred_check_branch
    %179 = sbr.rel (0) target = $region25
  $region24: #{evaluator_forward.1} parent=0 // pred_region
    _
  $region25: #{evaluator_forward.1} parent=0 // pred_fallthru
    _
  // Predicated region
  $region26: #{evaluator_forward.1} parent=0 // pred_check
    _
  $region27: #{evaluator_forward.1} parent=0 // pred_check_branch
    %181 = sbr.rel (0) target = $region29
  $region28: #{evaluator_forward.1} parent=0 // pred_region
    _
  $region29: #{evaluator_forward.1} parent=0 // pred_fallthru
    _

</llo_original>
